<compile_context>
chip_gen: v7x
topology: tpu7x:2x2x1
jax: 0.10.0
libtpu: 0.0.40
codegen_flags: <defaults>
</compile_context>

<pallas_src>
import functools

import jax
import jax.numpy as jnp
from jax import lax
from jax.experimental import pallas as pl
from jax.experimental.pallas import tpu as pltpu

LANE = 128
SUBLANE = 8
NEG_BIG = -1e30  # effectively -inf for padded logit lanes (exact in f32)


def _round_up(x, m):
    return (x + m - 1) // m * m


def rnn_seq_kernel(p_ref, h0_ref, wh_ref, out_ref, h_ref, *, hid_pad, tb, seq_len):
    """One grid iteration == TB RNN timesteps.

    p_ref:   (TB, B_pad, W_COLS)  precomputed x_t @ Wx + bias (streamed)
    h0_ref:  (B_pad, HID_PAD)     initial hidden (VMEM-resident, constant index)
    wh_ref:  (HID_PAD, W_COLS)    packed recurrent weights (VMEM-resident)
    out_ref: (TB, B_pad, OUT_PAD) per-step log-probs (streamed out, lane-dense)
    h_ref:   (B_pad, HID_PAD)     hidden state carried as a constant-index output
                                  block (accumulator pattern, no scratch buffer)
    """
    i = pl.program_id(0)

    @pl.when(i == 0)
    def _():
        h_ref[...] = h0_ref[...]

    wh = wh_ref[...]
    needs_mask = (seq_len % tb) != 0  # static: only mask when T % TB != 0

    def step(t, h):
        # y = (x_t @ Wx + b) + h @ Wh ; the x/bias part was precomputed outside
        # the recurrence, so only this matmul sits on the serial h-chain.
        y = p_ref[t].astype(jnp.float32) + jnp.dot(
            h.astype(wh.dtype), wh, preferred_element_type=jnp.float32)
        h_new = y[:, :hid_pad]        # lane-aligned slice (padded hidden cols stay 0)
        logits = y[:, hid_pad:]       # lane-aligned slice (padded lanes carry -1e30)

        # Numerically stable log-softmax over the 128 output lanes; padded lanes
        # contribute exp(~-1e30) == 0, so real lanes are exact.
        m = jnp.max(logits, axis=-1, keepdims=True)
        shifted = logits - m
        lse = jnp.log(jnp.sum(jnp.exp(shifted), axis=-1, keepdims=True))
        out_ref[t] = (shifted - lse).astype(out_ref.dtype)

        if needs_mask:
            valid = (i * tb + t) < seq_len
            h_new = jnp.where(valid, h_new, h)
        return h_new

    h_ref[...] = lax.fori_loop(0, tb, step, h_ref[...], unroll=True)


def prepare_rnn_params(w_i2h_t, b_i2h, w_i2o_t, b_i2o, input_size,
                       param_dtype=jnp.float32):
    """One-time packing of the two Linears into lane-padded slabs (hoisted out of
    the per-call path).  Returns (wx, wh, b_packed).

    Column layout of the packed slab (W_COLS = HID_PAD + OUT_PAD):
      [0, hidden)                : i2h   (padded cols zero -> padded hidden stays 0)
      [HID_PAD, HID_PAD + out)   : i2o   (padded logit lanes get a -1e30 bias)
    """
    hidden_size = w_i2h_t.shape[1]
    output_size = w_i2o_t.shape[1]
    hid_pad = _round_up(hidden_size, LANE)
    out_pad = _round_up(output_size, LANE)
    w_cols = hid_pad + out_pad
    f32 = jnp.float32

    wx = jnp.zeros((input_size, w_cols), f32)
    wx = wx.at[:, :hidden_size].set(w_i2h_t[:input_size].astype(f32))
    wx = wx.at[:, hid_pad:hid_pad + output_size].set(w_i2o_t[:input_size].astype(f32))

    wh = jnp.zeros((hid_pad, w_cols), f32)
    wh = wh.at[:hidden_size, :hidden_size].set(w_i2h_t[input_size:].astype(f32))
    wh = wh.at[:hidden_size, hid_pad:hid_pad + output_size].set(
        w_i2o_t[input_size:].astype(f32))

    b = jnp.zeros((1, w_cols), f32)
    b = b.at[0, :hidden_size].set(b_i2h.reshape(-1).astype(f32))
    b = b.at[0, hid_pad:].set(NEG_BIG)
    b = b.at[0, hid_pad:hid_pad + output_size].set(b_i2o.reshape(-1).astype(f32))

    # param_dtype=jnp.bfloat16 halves resident weight VMEM + doubles MXU rate on
    # v6e/v7x; bias stays f32 since it is folded into the f32 projection.
    return wx.astype(param_dtype), wh.astype(param_dtype), b


def rnn_forward_sequence(x_seq, h0, wx, wh, b, *, output_size, tb=4):
    """Run the RNN cell over a whole sequence in one pallas_call.

    x_seq: (T, B, input_size); h0: (B, hidden_size)
    wx/wh/b: packed slabs from prepare_rnn_params.
    Returns: (log-probs (T, B, output_size), final hidden (B, hidden_size))
    """
    T, B, input_size = x_seq.shape
    hidden_size = h0.shape[1]
    HID_PAD, W_COLS = wh.shape
    OUT_PAD = W_COLS - HID_PAD
    assert wx.shape[0] == input_size

    f32 = jnp.float32
    B_pad = B if B % SUBLANE == 0 else _round_up(max(B, SUBLANE), SUBLANE)
    tb = max(1, min(tb, T))
    T_pad = _round_up(T, tb)
    n_blocks = T_pad // tb

    # Pad activations only when needed (zero rows/cols are inert).
    x_p = x_seq.astype(f32)
    if (B_pad != B) or (T_pad != T):
        x_p = jnp.zeros((T_pad, B_pad, input_size), f32).at[:T, :B].set(x_p)
    h0_p = h0.astype(f32)
    if (B_pad != B) or (HID_PAD != hidden_size):
        h0_p = jnp.zeros((B_pad, HID_PAD), f32).at[:B, :hidden_size].set(h0.astype(f32))

    # Bulk non-recurrent projection + bias fold: one MXU-friendly matmul over all
    # T steps (M = T_pad*B_pad) instead of a tiny M=B, K=input_size matmul per step.
    p = jnp.dot(x_p.reshape(T_pad * B_pad, input_size).astype(wx.dtype), wx,
                preferred_element_type=f32) + b
    p = p.reshape(T_pad, B_pad, W_COLS)

    kernel = functools.partial(rnn_seq_kernel, hid_pad=HID_PAD, tb=tb, seq_len=T)

    out_p, hfin_p = pl.pallas_call(
        kernel,
        grid=(n_blocks,),
        in_specs=[
            pl.BlockSpec((tb, B_pad, W_COLS), lambda i: (i, 0, 0)),   # P (streamed)
            pl.BlockSpec((B_pad, HID_PAD), lambda i: (0, 0)),         # h0 (resident)
            pl.BlockSpec((HID_PAD, W_COLS), lambda i: (0, 0)),        # Wh (resident)
        ],
        out_specs=(
            pl.BlockSpec((tb, B_pad, OUT_PAD), lambda i: (i, 0, 0)),  # log-probs
            pl.BlockSpec((B_pad, HID_PAD), lambda i: (0, 0)),         # hidden accumulator
        ),
        out_shape=(
            jax.ShapeDtypeStruct((T_pad, B_pad, OUT_PAD), f32),
            jax.ShapeDtypeStruct((B_pad, HID_PAD), f32),
        ),
        compiler_params=pltpu.CompilerParams(
            dimension_semantics=("arbitrary",),   # true time dependence
        ),
    )(p, h0_p, wh)

    return out_p[:T, :B, :output_size], hfin_p[:B, :hidden_size]


def rnn_step(x, h, wx, wh, b, *, output_size):
    """Exact equivalent of the PyTorch module's forward(input, hidden)."""
    outs, h_new = rnn_forward_sequence(x[None], h, wx, wh, b,
                                       output_size=output_size, tb=1)
    return outs[0], h_new


def init_linear_params(key, fan_in, fan_out):
    """Deterministic PyTorch-style Linear init: U(-1/sqrt(fan_in), 1/sqrt(fan_in))."""
    kw, kb = jax.random.split(key)
    bound = 1.0 / jnp.sqrt(jnp.float32(fan_in))
    w_t = jax.random.uniform(kw, (fan_in, fan_out), jnp.float32, -bound, bound)
    bvec = jax.random.uniform(kb, (1, fan_out), jnp.float32, -bound, bound)
    return w_t, bvec


if __name__ == "__main__":
    # small, module-consistent shapes
    batch = 2
    seq_len = 8
    input_size = 16
    hidden_size = 32
    output_size = 8

    key = jax.random.PRNGKey(0)
    k_in, k_i2h, k_i2o = jax.random.split(key, 3)

    x_seq = jax.random.normal(k_in, (seq_len, batch, input_size), jnp.float32)
    h0 = jnp.zeros((batch, hidden_size), jnp.float32)   # initHidden, broadcast over batch

    w_i2h_t, b_i2h = init_linear_params(k_i2h, input_size + hidden_size, hidden_size)
    w_i2o_t, b_i2o = init_linear_params(k_i2o, input_size + hidden_size, output_size)

    # one-time packing (hoisted out of the forward call)
    wx, wh, b = prepare_rnn_params(w_i2h_t, b_i2h, w_i2o_t, b_i2o, input_size)

    fwd = jax.jit(functools.partial(rnn_forward_sequence,
                                    output_size=output_size, tb=4))

    # --- whole-sequence fused kernel ---
    outs, h_final = fwd(x_seq, h0, wx, wh, b)
    jax.block_until_ready((outs, h_final))

    # --- pure-JAX reference (mirrors the PyTorch module applied step by step) ---
    h_ref = h0
    ref_outs = []
    for t in range(seq_len):
        comb = jnp.concatenate([x_seq[t], h_ref], axis=1)
        h_ref = comb @ w_i2h_t + b_i2h
        logits = comb @ w_i2o_t + b_i2o
        ref_outs.append(jax.nn.log_softmax(logits, axis=1))
    ref_outs = jnp.stack(ref_outs)

    assert jnp.allclose(outs, ref_outs, atol=1e-4, rtol=1e-4), "sequence output mismatch"
    assert jnp.allclose(h_final, h_ref, atol=1e-4, rtol=1e-4), "final hidden mismatch"

    # --- single-step call (the module's exact forward signature) ---
    out1, h1 = rnn_step(x_seq[0], h0, wx, wh, b, output_size=output_size)
    jax.block_until_ready((out1, h1))
    comb0 = jnp.concatenate([x_seq[0], h0], axis=1)
    assert jnp.allclose(h1, comb0 @ w_i2h_t + b_i2h, atol=1e-5), "step hidden mismatch"
    assert jnp.allclose(out1, jax.nn.log_softmax(comb0 @ w_i2o_t + b_i2o, axis=1),
                        atol=1e-5), "step output mismatch"

    # TODO(synk): for very large batch, add a "parallel" batch grid axis (and v7x
    # second-core split of the i2o/softmax branch); unnecessary at these sizes.
    print("KERNEL_OK")
</pallas_src>

<mosaic_0001>
module attributes {stable_mosaic.version = 11 : i64} {
  func.func @rnn_seq_kernel(%arg0: i32, %arg1: memref<4x8x256xf32, #tpu.memory_space<vmem>>, %arg2: memref<8x128xf32, #tpu.memory_space<vmem>>, %arg3: memref<128x256xf32, #tpu.memory_space<vmem>>, %arg4: memref<4x8x128xf32, #tpu.memory_space<vmem>>, %arg5: memref<8x128xf32, #tpu.memory_space<vmem>>) attributes {dimension_semantics = [#tpu.dimension_semantics<arbitrary>], iteration_bounds = array<i64: 2>, scalar_prefetch = 0 : i64, scratch_operands = 0 : i64, tpu.core_type = #tpu.core_type<tc>, window_params = [{transform_indices = @transform_0, window_bounds = array<i64: 4, 8, 256>}, {pipeline_mode = #tpu.pipeline_mode<synchronous>, transform_indices = @transform_1, window_bounds = array<i64: 8, 128>}, {pipeline_mode = #tpu.pipeline_mode<synchronous>, transform_indices = @transform_2, window_bounds = array<i64: 128, 256>}, {transform_indices = @transform_3, window_bounds = array<i64: 4, 8, 128>}, {pipeline_mode = #tpu.pipeline_mode<synchronous>, transform_indices = @transform_4, window_bounds = array<i64: 8, 128>}]} {
    %c0_i32 = arith.constant 0 : i32
    %0 = arith.cmpi eq, %arg0, %c0_i32 : i32
    %1 = arith.extui %0 : i1 to i32
    %c0_i32_0 = arith.constant 0 : i32
    %2 = arith.cmpi ne, %1, %c0_i32_0 : i32
    scf.if %2 {
      %c0_34 = arith.constant 0 : index
      %c0_35 = arith.constant 0 : index
      %90 = vector.load %arg2[%c0_34, %c0_35] : memref<8x128xf32, #tpu.memory_space<vmem>>, vector<8x128xf32>
      %c0_36 = arith.constant 0 : index
      %c0_37 = arith.constant 0 : index
      %91 = vector.load %arg5[%c0_36, %c0_37] : memref<8x128xf32, #tpu.memory_space<vmem>>, vector<8x128xf32>
      tpu.vector_store %arg5[%c0_36, %c0_37], %90 {strides = array<i32>} : memref<8x128xf32, #tpu.memory_space<vmem>>, vector<8x128xf32>,
    } else {
    }
    %c0 = arith.constant 0 : index
    %c0_1 = arith.constant 0 : index
    %3 = vector.load %arg3[%c0, %c0_1] : memref<128x256xf32, #tpu.memory_space<vmem>>, vector<128x256xf32>
    %c0_2 = arith.constant 0 : index
    %c0_3 = arith.constant 0 : index
    %4 = vector.load %arg5[%c0_2, %c0_3] : memref<8x128xf32, #tpu.memory_space<vmem>>, vector<8x128xf32>
    %c0_i32_4 = arith.constant 0 : i32
    %5 = arith.index_cast %c0_i32_4 : i32 to index
    %c0_5 = arith.constant 0 : index
    %c0_6 = arith.constant 0 : index
    %6 = vector.load %arg1[%5, %c0_5, %c0_6] : memref<4x8x256xf32, #tpu.memory_space<vmem>>, vector<1x8x256xf32>
    %7 = vector.shape_cast %6 : vector<1x8x256xf32> to vector<8x256xf32>
    %cst = arith.constant dense<0.000000e+00> : vector<8x256xf32>
    %8 = tpu.matmul %4, %3, %cst {dimension_numbers = #tpu.dot_dimension_numbers<[1], [0], [0], [1], [0, 0, 1, 1], [], []>} : vector<8x128xf32>, vector<128x256xf32>, vector<8x256xf32> -> vector<8x256xf32>
    %9 = arith.addf %7, %8 : vector<8x256xf32>
    %10 = vector.extract_strided_slice %9 {offsets = [0, 0], sizes = [8, 128], strides = [1, 1]} : vector<8x256xf32> to vector<8x128xf32>
    %11 = vector.extract_strided_slice %9 {offsets = [0, 128], sizes = [8, 128], strides = [1, 1]} : vector<8x256xf32> to vector<8x128xf32>
    %cst_7 = arith.constant dense<0xFF800000> : vector<8xf32>
    %12 = vector.multi_reduction <maximumf>, %11, %cst_7 [1] : vector<8x128xf32> to vector<8xf32>
    %13 = vector.shape_cast %12 : vector<8xf32> to vector<8x1xf32>
    %14 = vector.broadcast %13 : vector<8x1xf32> to vector<8x128xf32>
    %15 = arith.subf %11, %14 : vector<8x128xf32>
    %16 = math.exp %15 : vector<8x128xf32>
    %cst_8 = arith.constant dense<0.000000e+00> : vector<8xf32>
    %17 = vector.multi_reduction <add>, %16, %cst_8 [1] : vector<8x128xf32> to vector<8xf32>
    %18 = vector.shape_cast %17 : vector<8xf32> to vector<8x1xf32>
    %19 = math.log %18 : vector<8x1xf32>
    %20 = vector.broadcast %19 : vector<8x1xf32> to vector<8x128xf32>
    %21 = arith.subf %15, %20 : vector<8x128xf32>
    %22 = arith.index_cast %c0_i32_4 : i32 to index
    %c0_9 = arith.constant 0 : index
    %c0_10 = arith.constant 0 : index
    %23 = vector.load %arg4[%22, %c0_9, %c0_10] : memref<4x8x128xf32, #tpu.memory_space<vmem>>, vector<1x8x128xf32>
    %24 = vector.shape_cast %23 : vector<1x8x128xf32> to vector<8x128xf32>
    %25 = vector.shape_cast %21 : vector<8x128xf32> to vector<1x8x128xf32>
    tpu.vector_store %arg4[%22, %c0_9, %c0_10], %25 {strides = array<i32>} : memref<4x8x128xf32, #tpu.memory_space<vmem>>, vector<1x8x128xf32>,
    %c1_i32 = arith.constant 1 : i32
    %26 = arith.index_cast %c1_i32 : i32 to index
    %c0_11 = arith.constant 0 : index
    %c0_12 = arith.constant 0 : index
    %27 = vector.load %arg1[%26, %c0_11, %c0_12] : memref<4x8x256xf32, #tpu.memory_space<vmem>>, vector<1x8x256xf32>
    %28 = vector.shape_cast %27 : vector<1x8x256xf32> to vector<8x256xf32>
    %cst_13 = arith.constant dense<0.000000e+00> : vector<8x256xf32>
    %29 = tpu.matmul %10, %3, %cst_13 {dimension_numbers = #tpu.dot_dimension_numbers<[1], [0], [0], [1], [0, 0, 1, 1], [], []>} : vector<8x128xf32>, vector<128x256xf32>, vector<8x256xf32> -> vector<8x256xf32>
    %30 = arith.addf %28, %29 : vector<8x256xf32>
    %31 = vector.extract_strided_slice %30 {offsets = [0, 0], sizes = [8, 128], strides = [1, 1]} : vector<8x256xf32> to vector<8x128xf32>
    %32 = vector.extract_strided_slice %30 {offsets = [0, 128], sizes = [8, 128], strides = [1, 1]} : vector<8x256xf32> to vector<8x128xf32>
    %cst_14 = arith.constant dense<0xFF800000> : vector<8xf32>
    %33 = vector.multi_reduction <maximumf>, %32, %cst_14 [1] : vector<8x128xf32> to vector<8xf32>
    %34 = vector.shape_cast %33 : vector<8xf32> to vector<8x1xf32>
    %35 = vector.broadcast %34 : vector<8x1xf32> to vector<8x128xf32>
    %36 = arith.subf %32, %35 : vector<8x128xf32>
    %37 = math.exp %36 : vector<8x128xf32>
    %cst_15 = arith.constant dense<0.000000e+00> : vector<8xf32>
    %38 = vector.multi_reduction <add>, %37, %cst_15 [1] : vector<8x128xf32> to vector<8xf32>
    %39 = vector.shape_cast %38 : vector<8xf32> to vector<8x1xf32>
    %40 = math.log %39 : vector<8x1xf32>
    %41 = vector.broadcast %40 : vector<8x1xf32> to vector<8x128xf32>
    %42 = arith.subf %36, %41 : vector<8x128xf32>
    %43 = arith.index_cast %c1_i32 : i32 to index
    %c0_16 = arith.constant 0 : index
    %c0_17 = arith.constant 0 : index
    %44 = vector.load %arg4[%43, %c0_16, %c0_17] : memref<4x8x128xf32, #tpu.memory_space<vmem>>, vector<1x8x128xf32>
    %45 = vector.shape_cast %44 : vector<1x8x128xf32> to vector<8x128xf32>
    %46 = vector.shape_cast %42 : vector<8x128xf32> to vector<1x8x128xf32>
    tpu.vector_store %arg4[%43, %c0_16, %c0_17], %46 {strides = array<i32>} : memref<4x8x128xf32, #tpu.memory_space<vmem>>, vector<1x8x128xf32>,
    %c2_i32 = arith.constant 2 : i32
    %47 = arith.index_cast %c2_i32 : i32 to index
    %c0_18 = arith.constant 0 : index
    %c0_19 = arith.constant 0 : index
    %48 = vector.load %arg1[%47, %c0_18, %c0_19] : memref<4x8x256xf32, #tpu.memory_space<vmem>>, vector<1x8x256xf32>
    %49 = vector.shape_cast %48 : vector<1x8x256xf32> to vector<8x256xf32>
    %cst_20 = arith.constant dense<0.000000e+00> : vector<8x256xf32>
    %50 = tpu.matmul %31, %3, %cst_20 {dimension_numbers = #tpu.dot_dimension_numbers<[1], [0], [0], [1], [0, 0, 1, 1], [], []>} : vector<8x128xf32>, vector<128x256xf32>, vector<8x256xf32> -> vector<8x256xf32>
    %51 = arith.addf %49, %50 : vector<8x256xf32>
    %52 = vector.extract_strided_slice %51 {offsets = [0, 0], sizes = [8, 128], strides = [1, 1]} : vector<8x256xf32> to vector<8x128xf32>
    %53 = vector.extract_strided_slice %51 {offsets = [0, 128], sizes = [8, 128], strides = [1, 1]} : vector<8x256xf32> to vector<8x128xf32>
    %cst_21 = arith.constant dense<0xFF800000> : vector<8xf32>
    %54 = vector.multi_reduction <maximumf>, %53, %cst_21 [1] : vector<8x128xf32> to vector<8xf32>
    %55 = vector.shape_cast %54 : vector<8xf32> to vector<8x1xf32>
    %56 = vector.broadcast %55 : vector<8x1xf32> to vector<8x128xf32>
    %57 = arith.subf %53, %56 : vector<8x128xf32>
    %58 = math.exp %57 : vector<8x128xf32>
    %cst_22 = arith.constant dense<0.000000e+00> : vector<8xf32>
    %59 = vector.multi_reduction <add>, %58, %cst_22 [1] : vector<8x128xf32> to vector<8xf32>
    %60 = vector.shape_cast %59 : vector<8xf32> to vector<8x1xf32>
    %61 = math.log %60 : vector<8x1xf32>
    %62 = vector.broadcast %61 : vector<8x1xf32> to vector<8x128xf32>
    %63 = arith.subf %57, %62 : vector<8x128xf32>
    %64 = arith.index_cast %c2_i32 : i32 to index
    %c0_23 = arith.constant 0 : index
    %c0_24 = arith.constant 0 : index
    %65 = vector.load %arg4[%64, %c0_23, %c0_24] : memref<4x8x128xf32, #tpu.memory_space<vmem>>, vector<1x8x128xf32>
    %66 = vector.shape_cast %65 : vector<1x8x128xf32> to vector<8x128xf32>
    %67 = vector.shape_cast %63 : vector<8x128xf32> to vector<1x8x128xf32>
    tpu.vector_store %arg4[%64, %c0_23, %c0_24], %67 {strides = array<i32>} : memref<4x8x128xf32, #tpu.memory_space<vmem>>, vector<1x8x128xf32>,
    %c3_i32 = arith.constant 3 : i32
    %68 = arith.index_cast %c3_i32 : i32 to index
    %c0_25 = arith.constant 0 : index
    %c0_26 = arith.constant 0 : index
    %69 = vector.load %arg1[%68, %c0_25, %c0_26] : memref<4x8x256xf32, #tpu.memory_space<vmem>>, vector<1x8x256xf32>
    %70 = vector.shape_cast %69 : vector<1x8x256xf32> to vector<8x256xf32>
    %cst_27 = arith.constant dense<0.000000e+00> : vector<8x256xf32>
    %71 = tpu.matmul %52, %3, %cst_27 {dimension_numbers = #tpu.dot_dimension_numbers<[1], [0], [0], [1], [0, 0, 1, 1], [], []>} : vector<8x128xf32>, vector<128x256xf32>, vector<8x256xf32> -> vector<8x256xf32>
    %72 = arith.addf %70, %71 : vector<8x256xf32>
    %73 = vector.extract_strided_slice %72 {offsets = [0, 0], sizes = [8, 128], strides = [1, 1]} : vector<8x256xf32> to vector<8x128xf32>
    %74 = vector.extract_strided_slice %72 {offsets = [0, 128], sizes = [8, 128], strides = [1, 1]} : vector<8x256xf32> to vector<8x128xf32>
    %cst_28 = arith.constant dense<0xFF800000> : vector<8xf32>
    %75 = vector.multi_reduction <maximumf>, %74, %cst_28 [1] : vector<8x128xf32> to vector<8xf32>
    %76 = vector.shape_cast %75 : vector<8xf32> to vector<8x1xf32>
    %77 = vector.broadcast %76 : vector<8x1xf32> to vector<8x128xf32>
    %78 = arith.subf %74, %77 : vector<8x128xf32>
    %79 = math.exp %78 : vector<8x128xf32>
    %cst_29 = arith.constant dense<0.000000e+00> : vector<8xf32>
    %80 = vector.multi_reduction <add>, %79, %cst_29 [1] : vector<8x128xf32> to vector<8xf32>
    %81 = vector.shape_cast %80 : vector<8xf32> to vector<8x1xf32>
    %82 = math.log %81 : vector<8x1xf32>
    %83 = vector.broadcast %82 : vector<8x1xf32> to vector<8x128xf32>
    %84 = arith.subf %78, %83 : vector<8x128xf32>
    %85 = arith.index_cast %c3_i32 : i32 to index
    %c0_30 = arith.constant 0 : index
    %c0_31 = arith.constant 0 : index
    %86 = vector.load %arg4[%85, %c0_30, %c0_31] : memref<4x8x128xf32, #tpu.memory_space<vmem>>, vector<1x8x128xf32>
    %87 = vector.shape_cast %86 : vector<1x8x128xf32> to vector<8x128xf32>
    %88 = vector.shape_cast %84 : vector<8x128xf32> to vector<1x8x128xf32>
    tpu.vector_store %arg4[%85, %c0_30, %c0_31], %88 {strides = array<i32>} : memref<4x8x128xf32, #tpu.memory_space<vmem>>, vector<1x8x128xf32>,
    %c4_i32 = arith.constant 4 : i32
    %c0_32 = arith.constant 0 : index
    %c0_33 = arith.constant 0 : index
    %89 = vector.load %arg5[%c0_32, %c0_33] : memref<8x128xf32, #tpu.memory_space<vmem>>, vector<8x128xf32>
    tpu.vector_store %arg5[%c0_32, %c0_33], %73 {strides = array<i32>} : memref<8x128xf32, #tpu.memory_space<vmem>>, vector<8x128xf32>,
    return
  }
  func.func @transform_0(%arg0: i32) -> (i32, i32, i32) {
    %c0_i32 = arith.constant 0 : i32
    %c0_i32_0 = arith.constant 0 : i32
    %c0_i32_1 = arith.constant 0 : i32
    return %arg0, %c0_i32, %c0_i32_0 : i32, i32, i32
  }
  func.func @transform_1(%arg0: i32) -> (i32, i32) {
    %c0_i32 = arith.constant 0 : i32
    %c0_i32_0 = arith.constant 0 : i32
    %c0_i32_1 = arith.constant 0 : i32
    return %c0_i32, %c0_i32_0 : i32, i32
  }
  func.func @transform_2(%arg0: i32) -> (i32, i32) {
    %c0_i32 = arith.constant 0 : i32
    %c0_i32_0 = arith.constant 0 : i32
    %c0_i32_1 = arith.constant 0 : i32
    return %c0_i32, %c0_i32_0 : i32, i32
  }
  func.func @transform_3(%arg0: i32) -> (i32, i32, i32) {
    %c0_i32 = arith.constant 0 : i32
    %c0_i32_0 = arith.constant 0 : i32
    %c0_i32_1 = arith.constant 0 : i32
    return %arg0, %c0_i32, %c0_i32_0 : i32, i32, i32
  }
  func.func @transform_4(%arg0: i32) -> (i32, i32) {
    %c0_i32 = arith.constant 0 : i32
    %c0_i32_0 = arith.constant 0 : i32
    %c0_i32_1 = arith.constant 0 : i32
    return %c0_i32, %c0_i32_0 : i32, i32
  }
}

</mosaic_0001>

<llo_original>
// kernel: rnn_forward_sequence.1
$region0: #{rnn_forward_sequence.1}
  #allocation0 [shape = 'u32[]', space=smem, size = 0x4, offset = 0x4, fixed_abs, tag = 'smem constant byte address 0x4 - core index']
  #allocation1 [shape = 'u32[144,128]{1,0:T(1,128)}', space=vmem, size = 0x12000, scoped, tag = 'internal scratch']
  %s0 = inlined_call_operand.vmem [shape: f32[8,8,256], index: 0, kind: input, shape index: {}]
  %s1 = inlined_call_operand.vmem [shape: f32[8,128], index: 1, kind: input, shape index: {}]
  %s2 = inlined_call_operand.hbm [shape: f32[128,256], index: 2, kind: input, shape index: {}]
  %s3 = inlined_call_operand.vmem [shape: f32[8,8,128], index: 3, kind: output, shape index: {0}]
  %s4 = inlined_call_operand.vmem [shape: f32[8,128], index: 4, kind: output, shape index: {1}]
  %5 = xla_tuple %s3, %s4
  %s6 = sld [smem:[#allocation0]]
  $region61: #{rnn_forward_sequence.1} parent=0
    _
  %s8 = ssub.s32 1, %s6
  %s9 = scalar_select 0, %s8, %s6
  $region1: #{rnn_forward_sequence.1} parent=0
    #allocation2 [shape = 'u8[131072]{0}', space=vmem, size = 0x20000, scoped, tag = 'input window, operand 2, single buffered']
    #allocation3 [shape = 's32[2]{0}', space=sflag, size = 0x8, scoped, tag = 'scoped memory for rnn_forward_sequence.1']
    %10 = vsyncpa [#allocation3], 0
    loop: start=0, step=1, limit=4
    $region2: #{rnn_forward_sequence.1} parent=1 // loop_pre_header
      _
    $region3: #{rnn_forward_sequence.1} parent=1 // loop_header
      %s12 = sphi 0, %s16
      %p13 = scmp.ge.s32.totalorder %s12, 4
      %s22 = sphi 0, %s24
      %s25 = sphi 0, %s22
      %s26 = sphi 0, %s25
      %s42 = sphi 0, %s26
      %s46 = sphi 0, %s46
      %s48 = sphi 0, %s46
      %s49 = sphi 0, %s48
      %s63 = sphi 0, %s49
      %s67 = sphi 0, %s67
      %s69 = sphi 0, %s67
      %s70 = sphi 0, %s69
      %s84 = sphi 0, %s70
      %s90 = sphi 0, %s92
      %s93 = sphi 0, %s90
      %s94 = sphi 0, %s93
      %s110 = sphi 0, %s94
      %s114 = sphi 0, %s114
      %s116 = sphi 0, %s114
      %s117 = sphi 0, %s116
      %s131 = sphi 0, %s117
    $region4: #{rnn_forward_sequence.1} parent=1 // loop_header_branch
      %15 = sbr.rel (%p13) target = $region8
    $region5: #{rnn_forward_sequence.1} parent=1 // loop_body
      %s17 = ssub.s32 %s12, 1
      %s18 = ssub.s32 %s12, 2
      %s19 = sadd.s32 %s12, 1
      %s20 = ssub.s32 %s12, %s19
      %p21 = scmp.eq.s32.totalorder %s20, 0
      %s23 = sadd.s32 %s22, 1
      %s24 = scalar_select %p21, %s22, %s23
      %p27 = pneg %p21
      %p28 = scmp.eq.s32.totalorder %s12, 1
      %p29 = por %p27, %p28
      %p30 = scmp.ne.s32.totalorder %s22, %s25
      %p31 = scmp.eq.s32.totalorder %s12, 0
      %p32 = por %p30, %p31
      %p33 = scmp.ne.s32.totalorder %s22, %s25
      %p34 = scmp.eq.s32.totalorder %s17, 1
      %p35 = por %p33, %p34
      %p36 = scmp.ne.s32.totalorder %s25, %s26
      %p37 = scmp.eq.s32.totalorder %s17, 0
      %p38 = por %p36, %p37
      %p39 = scmp.ne.s32.totalorder %s25, %s26
      %p40 = scmp.eq.s32.totalorder %s18, 1
      %p41 = por %p39, %p40
      %p43 = scmp.ne.s32.totalorder %s26, %s42
      %p44 = scmp.eq.s32.totalorder %s18, 0
      %p45 = por %p43, %p44
      %s47 = sadd.s32 %s46, 1
      %p50 = scmp.eq.s32.totalorder %s12, 1
      %p51 = scmp.ne.s32.totalorder %s46, %s48
      %p52 = scmp.eq.s32.totalorder %s12, 0
      %p53 = por %p51, %p52
      %p54 = scmp.ne.s32.totalorder %s46, %s48
      %p55 = scmp.eq.s32.totalorder %s17, 1
      %p56 = por %p54, %p55
      %p57 = scmp.ne.s32.totalorder %s48, %s49
      %p58 = scmp.eq.s32.totalorder %s17, 0
      %p59 = por %p57, %p58
      %p60 = scmp.ne.s32.totalorder %s48, %s49
      %p61 = scmp.eq.s32.totalorder %s18, 1
      %p62 = por %p60, %p61
      %p64 = scmp.ne.s32.totalorder %s49, %s63
      %p65 = scmp.eq.s32.totalorder %s18, 0
      %p66 = por %p64, %p65
      %s68 = sadd.s32 %s67, 1
      %p71 = scmp.eq.s32.totalorder %s12, 1
      %p72 = scmp.ne.s32.totalorder %s67, %s69
      %p73 = scmp.eq.s32.totalorder %s12, 0
      %p74 = por %p72, %p73
      %p75 = scmp.ne.s32.totalorder %s67, %s69
      %p76 = scmp.eq.s32.totalorder %s17, 1
      %p77 = por %p75, %p76
      %p78 = scmp.ne.s32.totalorder %s69, %s70
      %p79 = scmp.eq.s32.totalorder %s17, 0
      %p80 = por %p78, %p79
      %p81 = scmp.ne.s32.totalorder %s69, %s70
      %p82 = scmp.eq.s32.totalorder %s18, 1
      %p83 = por %p81, %p82
      %p85 = scmp.ne.s32.totalorder %s70, %s84
      %p86 = scmp.eq.s32.totalorder %s18, 0
      %p87 = por %p85, %p86
      %s88 = ssub.s32 %s12, %s19
      %p89 = scmp.eq.s32.totalorder %s88, 0
      %s91 = sadd.s32 %s90, 1
      %s92 = scalar_select %p89, %s90, %s91
      %p95 = pneg %p89
      %p96 = scmp.eq.s32.totalorder %s12, 1
      %p97 = por %p95, %p96
      %p98 = scmp.ne.s32.totalorder %s90, %s93
      %p99 = scmp.eq.s32.totalorder %s12, 0
      %p100 = por %p98, %p99
      %p101 = scmp.ne.s32.totalorder %s90, %s93
      %p102 = scmp.eq.s32.totalorder %s17, 1
      %p103 = por %p101, %p102
      %p104 = scmp.ne.s32.totalorder %s93, %s94
      %p105 = scmp.eq.s32.totalorder %s17, 0
      %p106 = por %p104, %p105
      %p107 = scmp.ne.s32.totalorder %s93, %s94
      %p108 = scmp.eq.s32.totalorder %s18, 1
      %p109 = por %p107, %p108
      %p111 = scmp.ne.s32.totalorder %s94, %s110
      %p112 = scmp.eq.s32.totalorder %s18, 0
      %p113 = por %p111, %p112
      %s115 = sadd.s32 %s114, 1
      %p118 = scmp.eq.s32.totalorder %s12, 1
      %p119 = scmp.ne.s32.totalorder %s114, %s116
      %p120 = scmp.eq.s32.totalorder %s12, 0
      %p121 = por %p119, %p120
      %p122 = scmp.ne.s32.totalorder %s114, %s116
      %p123 = scmp.eq.s32.totalorder %s17, 1
      %p124 = por %p122, %p123
      %p125 = scmp.ne.s32.totalorder %s116, %s117
      %p126 = scmp.eq.s32.totalorder %s17, 0
      %p127 = por %p125, %p126
      %p128 = scmp.ne.s32.totalorder %s116, %s117
      %p129 = scmp.eq.s32.totalorder %s18, 1
      %p130 = por %p128, %p129
      %p132 = scmp.ne.s32.totalorder %s117, %s131
      %p133 = scmp.eq.s32.totalorder %s18, 0
      %p134 = por %p132, %p133
      %p135 = scmp.le.s32.totalorder 1, %s12
      %p136 = scmp.lt.s32.totalorder %s12, 3
      %p137 = pnand %p135, %p136
      %p138 = pneg %p137
      // Predicated region
      $region9: #{rnn_forward_sequence.1} parent=5 // pred_check
        _
      $region10: #{rnn_forward_sequence.1} parent=5 // pred_check_branch
        %140 = sbr.rel (%p137) target = $region12
      $region11: #{rnn_forward_sequence.1} parent=5 // pred_region
        %s141 = ssub.s32 %s12, 1
        // Predicated region
        $region13: #{rnn_forward_sequence.1} parent=11 // pred_check
          %p142 = pneg %p59
        $region14: #{rnn_forward_sequence.1} parent=11 // pred_check_branch
          %144 = sbr.rel (%p142) target = $region16
        $region15: #{rnn_forward_sequence.1} parent=11 // pred_region
          _
        $region16: #{rnn_forward_sequence.1} parent=11 // pred_fallthru
          _
        // Predicated region
        $region17: #{rnn_forward_sequence.1} parent=11 // pred_check
          %p145 = pneg %p80
        $region18: #{rnn_forward_sequence.1} parent=11 // pred_check_branch
          %147 = sbr.rel (%p145) target = $region20
        $region19: #{rnn_forward_sequence.1} parent=11 // pred_region
          %s149 = ssub.s32 4096, 4096
          %150 = vsyncadd [#allocation3], %s149
          %s151 = sshll.u32 [#allocation2], 4
          %s152 = int_to_ptr.vmem [resolvable:$true] %s151
          %157 = dma.hbm_to_vmem [thread:$0]  %s2, 4096, %s152, [#allocation3], 256, 256, 16
        $region20: #{rnn_forward_sequence.1} parent=11 // pred_fallthru
          _
      $region12: #{rnn_forward_sequence.1} parent=5 // pred_fallthru
        _
      %p158 = scmp.lt.s32.totalorder %s12, 2
      // Predicated region
      $region21: #{rnn_forward_sequence.1} parent=5 // pred_check
        %p159 = pneg %p158
      $region22: #{rnn_forward_sequence.1} parent=5 // pred_check_branch
        %161 = sbr.rel (%p159) target = $region24
      $region23: #{rnn_forward_sequence.1} parent=5 // pred_region
        // Predicated region
        $region25: #{rnn_forward_sequence.1} parent=23 // pred_check
          %p162 = pneg %p32
        $region26: #{rnn_forward_sequence.1} parent=23 // pred_check_branch
          %164 = sbr.rel (%p162) target = $region28
        $region27: #{rnn_forward_sequence.1} parent=23 // pred_region
          %s165 = smul.u32 4, %s12
          %p166 = scmp.lt.s32.totalorder %s165, 7
          %s167 = scalar_select %p166, %s165, 7
          %s168 = smul.addr %s167, 2
          %s169 = smul.addr %s168, 8
          %s170 = scalar_lea.vmem %s0, %s169
          %s171 = smul.u32 4, %s12
        $region28: #{rnn_forward_sequence.1} parent=23 // pred_fallthru
          _
      $region24: #{rnn_forward_sequence.1} parent=5 // pred_fallthru
        _
      %p172 = scmp.le.s32.totalorder 1, %s12
      %p173 = scmp.lt.s32.totalorder %s12, 3
      %p174 = pnand %p172, %p173
      %p175 = pneg %p174
      // Predicated region
      $region29: #{rnn_forward_sequence.1} parent=5 // pred_check
        _
      $region30: #{rnn_forward_sequence.1} parent=5 // pred_check_branch
        %177 = sbr.rel (%p174) target = $region32
      $region31: #{rnn_forward_sequence.1} parent=5 // pred_region
        %s178 = ssub.s32 %s12, 1
        // Predicated region
        $region33: #{rnn_forward_sequence.1} parent=31 // pred_check
          %p179 = pneg %p80
        $region34: #{rnn_forward_sequence.1} parent=31 // pred_check_branch
          %181 = sbr.rel (%p179) target = $region36
        $region35: #{rnn_forward_sequence.1} parent=31 // pred_region
          %182 = dma.done [#allocation3], 4096
        $region36: #{rnn_forward_sequence.1} parent=31 // pred_fallthru
          _
        %s183 = smul.u32 4, %s17
        %p184 = scmp.lt.s32.totalorder %s183, 7
        %s185 = scalar_select %p184, %s183, 7
        %s186 = smul.addr %s185, 2
        %s187 = smul.addr %s186, 8
        %s188 = scalar_lea.vmem %s0, %s187
        %p189 = pneg %p38
        %p190 = pneg %p35
        %p191 = pneg %p59
        %p192 = pneg %p56
        %p193 = pneg %p80
        %p194 = pneg %p77
        %p195 = pneg %p106
        %p196 = pneg %p103
        %s197 = smul.u32 4, %s17
        %p198 = scmp.lt.s32.totalorder %s197, 7
        %s199 = scalar_select %p198, %s197, 7
        %s200 = smul.addr %s199, 8
        %s201 = scalar_lea.vmem %s3, %s200
        %p202 = pneg %p127
        %p203 = pneg %p124
        %s204 = smul.u32 4, %s17
        %p205 = scmp.lt.s32.totalorder %s204, 7
        %s206 = scalar_select %p205, %s204, 7
        %s207 = smul.addr %s206, 2
        %s208 = smul.addr %s207, 8
        %s209 = scalar_lea.vmem %s0, %s208
        %s210 = smul.u32 4, %s17
        %s211 = smul.u32 4, %s17
        %p212 = scmp.lt.s32.totalorder %s211, 7
        %s213 = scalar_select %p212, %s211, 7
        %s214 = smul.addr %s213, 8
        %s215 = scalar_lea.vmem %s3, %s214
        %s216 = smul.u32 4, %s17
        %p217 = scmp.eq.s32.totalorder %s17, 0
        // Predicated region
        $region37: #{rnn_forward_sequence.1} parent=31 // pred_check
          %p218 = pneg %p217
        $region38: #{rnn_forward_sequence.1} parent=31 // pred_check_branch
          %220 = sbr.rel (%p218) target = $region40
        $region39: #{rnn_forward_sequence.1} parent=31 // pred_region
          %v221 = vld [vmem:[%s1] sm:$0xff]
          %222 = vst [vmem:[%s4] sm:$0xff] %v221
        $region40: #{rnn_forward_sequence.1} parent=31 // pred_fallthru
          _
        %v223 = vld [vmem:[#allocation2] sm:$0xff]
        %v224 = vld [vmem:[#allocation2 + $0x8] sm:$0xff]
        %v225 = vld [vmem:[#allocation2 + $0x10] sm:$0xff]
        %v226 = vld [vmem:[#allocation2 + $0x18] sm:$0xff]
        %v227 = vld [vmem:[#allocation2 + $0x20] sm:$0xff]
        %v228 = vld [vmem:[#allocation2 + $0x28] sm:$0xff]
        %v229 = vld [vmem:[#allocation2 + $0x30] sm:$0xff]
        %v230 = vld [vmem:[#allocation2 + $0x38] sm:$0xff]
        %v231 = vld [vmem:[#allocation2 + $0x40] sm:$0xff]
        %v232 = vld [vmem:[#allocation2 + $0x48] sm:$0xff]
        %v233 = vld [vmem:[#allocation2 + $0x50] sm:$0xff]
        %v234 = vld [vmem:[#allocation2 + $0x58] sm:$0xff]
        %v235 = vld [vmem:[#allocation2 + $0x60] sm:$0xff]
        %v236 = vld [vmem:[#allocation2 + $0x68] sm:$0xff]
        %v237 = vld [vmem:[#allocation2 + $0x70] sm:$0xff]
        %v238 = vld [vmem:[#allocation2 + $0x78] sm:$0xff]
        %v239 = vld [vmem:[#allocation2 + $0x80] sm:$0xff]
        %v240 = vld [vmem:[#allocation2 + $0x88] sm:$0xff]
        %v241 = vld [vmem:[#allocation2 + $0x90] sm:$0xff]
        %v242 = vld [vmem:[#allocation2 + $0x98] sm:$0xff]
        %v243 = vld [vmem:[#allocation2 + $0xa0] sm:$0xff]
        %v244 = vld [vmem:[#allocation2 + $0xa8] sm:$0xff]
        %v245 = vld [vmem:[#allocation2 + $0xb0] sm:$0xff]
        %v246 = vld [vmem:[#allocation2 + $0xb8] sm:$0xff]
        %v247 = vld [vmem:[#allocation2 + $0xc0] sm:$0xff]
        %v248 = vld [vmem:[#allocation2 + $0xc8] sm:$0xff]
        %v249 = vld [vmem:[#allocation2 + $0xd0] sm:$0xff]
        %v250 = vld [vmem:[#allocation2 + $0xd8] sm:$0xff]
        %v251 = vld [vmem:[#allocation2 + $0xe0] sm:$0xff]
        %v252 = vld [vmem:[#allocation2 + $0xe8] sm:$0xff]
        %v253 = vld [vmem:[#allocation2 + $0xf0] sm:$0xff]
        %v254 = vld [vmem:[#allocation2 + $0xf8] sm:$0xff]
        %v255 = vld [vmem:[%s4] sm:$0xff]
        %v256 = vld [vmem:[%s209] sm:$0xff]
        %v257 = vld [vmem:[%s209 + $0x8] sm:$0xff]
        %258 = vmatprep.subr.mxu0 %v224
        %259 = vmatpush1.msra.mxu0 %v223
        %260 = vmatprep.subr.mxu0 %v226
        %261 = vmatpush1.msra.mxu0 %v225
        %262 = vmatprep.subr.mxu0 %v228
        %263 = vmatpush1.msra.mxu0 %v227
        %264 = vmatprep.subr.mxu0 %v230
        %265 = vmatpush1.msra.mxu0 %v229
        %266 = vmatprep.subr.mxu0 %v232
        %267 = vmatpush1.msra.mxu0 %v231
        %268 = vmatprep.subr.mxu0 %v234
        %269 = vmatpush1.msra.mxu0 %v233
        %270 = vmatprep.subr.mxu0 %v236
        %271 = vmatpush1.msra.mxu0 %v235
        %272 = vmatprep.subr.mxu0 %v238
        %273 = vmatpush1.msra.mxu0 %v237
        %274 = vmatprep.subr.mxu0 %v240
        %275 = vmatpush1.msra.mxu0 %v239
        %276 = vmatprep.subr.mxu0 %v242
        %277 = vmatpush1.msra.mxu0 %v241
        %278 = vmatprep.subr.mxu0 %v244
        %279 = vmatpush1.msra.mxu0 %v243
        %280 = vmatprep.subr.mxu0 %v246
        %281 = vmatpush1.msra.mxu0 %v245
        %282 = vmatprep.subr.mxu0 %v248
        %283 = vmatpush1.msra.mxu0 %v247
        %284 = vmatprep.subr.mxu0 %v250
        %285 = vmatpush1.msra.mxu0 %v249
        %286 = vmatprep.subr.mxu0 %v252
        %287 = vmatpush1.msra.mxu0 %v251
        %288 = vmatprep.subr.mxu0 %v254
        %289 = vmatpush1.msra.mxu0 %v253
        %290 = vmatprep.subr.mxu0 0.0
        %291 = vmatpush1.msra.mxu0 0.0
        %292 = vmatprep.subr.mxu0 0.0
        %293 = vmatpush1.msra.mxu0 0.0
        %294 = vmatprep.subr.mxu0 0.0
        %295 = vmatpush1.msra.mxu0 0.0
        %296 = vmatprep.subr.mxu0 0.0
        %297 = vmatpush1.msra.mxu0 0.0
        %298 = vmatprep.subr.mxu0 0.0
        %299 = vmatpush1.msra.mxu0 0.0
        %300 = vmatprep.subr.mxu0 0.0
        %301 = vmatpush1.msra.mxu0 0.0
        %302 = vmatprep.subr.mxu0 0.0
        %303 = vmatpush1.msra.mxu0 0.0
        %304 = vmatprep.subr.mxu0 0.0
        %305 = vmatpush1.msra.mxu0 0.0
        %306 = vmatprep.subr.mxu0 0.0
        %307 = vmatpush1.msra.mxu0 0.0
        %308 = vmatprep.subr.mxu0 0.0
        %309 = vmatpush1.msra.mxu0 0.0
        %310 = vmatprep.subr.mxu0 0.0
        %311 = vmatpush1.msra.mxu0 0.0
        %312 = vmatprep.subr.mxu0 0.0
        %313 = vmatpush1.msra.mxu0 0.0
        %314 = vmatprep.subr.mxu0 0.0
        %315 = vmatpush1.msra.mxu0 0.0
        %316 = vmatprep.subr.mxu0 0.0
        %317 = vmatpush1.msra.mxu0 0.0
        %318 = vmatprep.subr.mxu0 0.0
        %319 = vmatpush1.msra.mxu0 0.0
        %320 = vmatprep.subr.mxu0 0.0
        %321 = vmatpush1.msra.mxu0 0.0
        %322 = vmatprep.mubr.f32.mxu0 0.0
        %323 = vmatmul.mubr.f32.gmra.mrb[0].mxu0 %v255
        %v324 = vpop.f32.mrb[0].mxu0
        %v325 = vadd.f32 0.0, %v324
        %v326 = vpop.f32.mrb[0].mxu0
        %v327 = vadd.f32 0.0, %v326
        %328 = vdwg.mxu0
        %v329 = vadd.f32 %v256, %v325
        %v330 = vadd.f32 %v257, %v327
        %331 = vmax.xlane.f32.xlu0 %v330
        %v332 = vpop.xlane.xlu0 %331
        %v333 = vsub.f32 %v330, %v332
        %v334 = vmul.f32 %v333, 1.442695
        %v335 = vpow.pop %v334
        %336 = vadd.xlane.f32.xlu0 %v335
        %v337 = vpop.xlane.xlu0 %336
        %v338 = vlog2.pop %v337
        %v339 = vmul.f32 %v338, 0.6931472
        %v340 = vsub.f32 %v333, %v339
        %341 = vst [vmem:[%s215] sm:$0xff] %v340
        %s342 = scalar_lea.vmem %s209, 16
        %v343 = vld [vmem:[%s342] sm:$0xff]
        %v344 = vld [vmem:[%s342 + $0x8] sm:$0xff]
        %345 = vmatprep.subr.mxu0 %v224
        %346 = vmatpush1.msra.mxu0 %v223
        %347 = vmatprep.subr.mxu0 %v226
        %348 = vmatpush1.msra.mxu0 %v225
        %349 = vmatprep.subr.mxu0 %v228
        %350 = vmatpush1.msra.mxu0 %v227
        %351 = vmatprep.subr.mxu0 %v230
        %352 = vmatpush1.msra.mxu0 %v229
        %353 = vmatprep.subr.mxu0 %v232
        %354 = vmatpush1.msra.mxu0 %v231
        %355 = vmatprep.subr.mxu0 %v234
        %356 = vmatpush1.msra.mxu0 %v233
        %357 = vmatprep.subr.mxu0 %v236
        %358 = vmatpush1.msra.mxu0 %v235
        %359 = vmatprep.subr.mxu0 %v238
        %360 = vmatpush1.msra.mxu0 %v237
        %361 = vmatprep.subr.mxu0 %v240
        %362 = vmatpush1.msra.mxu0 %v239
        %363 = vmatprep.subr.mxu0 %v242
        %364 = vmatpush1.msra.mxu0 %v241
        %365 = vmatprep.subr.mxu0 %v244
        %366 = vmatpush1.msra.mxu0 %v243
        %367 = vmatprep.subr.mxu0 %v246
        %368 = vmatpush1.msra.mxu0 %v245
        %369 = vmatprep.subr.mxu0 %v248
        %370 = vmatpush1.msra.mxu0 %v247
        %371 = vmatprep.subr.mxu0 %v250
        %372 = vmatpush1.msra.mxu0 %v249
        %373 = vmatprep.subr.mxu0 %v252
        %374 = vmatpush1.msra.mxu0 %v251
        %375 = vmatprep.subr.mxu0 %v254
        %376 = vmatpush1.msra.mxu0 %v253
        %377 = vmatprep.subr.mxu0 0.0
        %378 = vmatpush1.msra.mxu0 0.0
        %379 = vmatprep.subr.mxu0 0.0
        %380 = vmatpush1.msra.mxu0 0.0
        %381 = vmatprep.subr.mxu0 0.0
        %382 = vmatpush1.msra.mxu0 0.0
        %383 = vmatprep.subr.mxu0 0.0
        %384 = vmatpush1.msra.mxu0 0.0
        %385 = vmatprep.subr.mxu0 0.0
        %386 = vmatpush1.msra.mxu0 0.0
        %387 = vmatprep.subr.mxu0 0.0
        %388 = vmatpush1.msra.mxu0 0.0
        %389 = vmatprep.subr.mxu0 0.0
        %390 = vmatpush1.msra.mxu0 0.0
        %391 = vmatprep.subr.mxu0 0.0
        %392 = vmatpush1.msra.mxu0 0.0
        %393 = vmatprep.subr.mxu0 0.0
        %394 = vmatpush1.msra.mxu0 0.0
        %395 = vmatprep.subr.mxu0 0.0
        %396 = vmatpush1.msra.mxu0 0.0
        %397 = vmatprep.subr.mxu0 0.0
        %398 = vmatpush1.msra.mxu0 0.0
        %399 = vmatprep.subr.mxu0 0.0
        %400 = vmatpush1.msra.mxu0 0.0
        %401 = vmatprep.subr.mxu0 0.0
        %402 = vmatpush1.msra.mxu0 0.0
        %403 = vmatprep.subr.mxu0 0.0
        %404 = vmatpush1.msra.mxu0 0.0
        %405 = vmatprep.subr.mxu0 0.0
        %406 = vmatpush1.msra.mxu0 0.0
        %407 = vmatprep.subr.mxu0 0.0
        %408 = vmatpush1.msra.mxu0 0.0
        %409 = vmatprep.mubr.f32.mxu0 0.0
        %410 = vmatmul.mubr.f32.gmra.mrb[0].mxu0 %v329
        %v411 = vpop.f32.mrb[0].mxu0
        %v412 = vadd.f32 0.0, %v411
        %v413 = vpop.f32.mrb[0].mxu0
        %v414 = vadd.f32 0.0, %v413
        %415 = vdwg.mxu0
        %v416 = vadd.f32 %v343, %v412
        %v417 = vadd.f32 %v344, %v414
        %418 = vmax.xlane.f32.xlu0 %v417
        %v419 = vpop.xlane.xlu0 %418
        %v420 = vsub.f32 %v417, %v419
        %v421 = vmul.f32 %v420, 1.442695
        %v422 = vpow.pop %v421
        %423 = vadd.xlane.f32.xlu0 %v422
        %v424 = vpop.xlane.xlu0 %423
        %v425 = vlog2.pop %v424
        %v426 = vmul.f32 %v425, 0.6931472
        %v427 = vsub.f32 %v420, %v426
        %s428 = scalar_lea.vmem %s215, 8
        %429 = vst [vmem:[%s428] sm:$0xff] %v427
        %s430 = scalar_lea.vmem %s209, 32
        %v431 = vld [vmem:[%s430] sm:$0xff]
        %v432 = vld [vmem:[%s430 + $0x8] sm:$0xff]
        %433 = vmatprep.subr.mxu0 %v224
        %434 = vmatpush1.msra.mxu0 %v223
        %435 = vmatprep.subr.mxu0 %v226
        %436 = vmatpush1.msra.mxu0 %v225
        %437 = vmatprep.subr.mxu0 %v228
        %438 = vmatpush1.msra.mxu0 %v227
        %439 = vmatprep.subr.mxu0 %v230
        %440 = vmatpush1.msra.mxu0 %v229
        %441 = vmatprep.subr.mxu0 %v232
        %442 = vmatpush1.msra.mxu0 %v231
        %443 = vmatprep.subr.mxu0 %v234
        %444 = vmatpush1.msra.mxu0 %v233
        %445 = vmatprep.subr.mxu0 %v236
        %446 = vmatpush1.msra.mxu0 %v235
        %447 = vmatprep.subr.mxu0 %v238
        %448 = vmatpush1.msra.mxu0 %v237
        %449 = vmatprep.subr.mxu0 %v240
        %450 = vmatpush1.msra.mxu0 %v239
        %451 = vmatprep.subr.mxu0 %v242
        %452 = vmatpush1.msra.mxu0 %v241
        %453 = vmatprep.subr.mxu0 %v244
        %454 = vmatpush1.msra.mxu0 %v243
        %455 = vmatprep.subr.mxu0 %v246
        %456 = vmatpush1.msra.mxu0 %v245
        %457 = vmatprep.subr.mxu0 %v248
        %458 = vmatpush1.msra.mxu0 %v247
        %459 = vmatprep.subr.mxu0 %v250
        %460 = vmatpush1.msra.mxu0 %v249
        %461 = vmatprep.subr.mxu0 %v252
        %462 = vmatpush1.msra.mxu0 %v251
        %463 = vmatprep.subr.mxu0 %v254
        %464 = vmatpush1.msra.mxu0 %v253
        %465 = vmatprep.subr.mxu0 0.0
        %466 = vmatpush1.msra.mxu0 0.0
        %467 = vmatprep.subr.mxu0 0.0
        %468 = vmatpush1.msra.mxu0 0.0
        %469 = vmatprep.subr.mxu0 0.0
        %470 = vmatpush1.msra.mxu0 0.0
        %471 = vmatprep.subr.mxu0 0.0
        %472 = vmatpush1.msra.mxu0 0.0
        %473 = vmatprep.subr.mxu0 0.0
        %474 = vmatpush1.msra.mxu0 0.0
        %475 = vmatprep.subr.mxu0 0.0
        %476 = vmatpush1.msra.mxu0 0.0
        %477 = vmatprep.subr.mxu0 0.0
        %478 = vmatpush1.msra.mxu0 0.0
        %479 = vmatprep.subr.mxu0 0.0
        %480 = vmatpush1.msra.mxu0 0.0
        %481 = vmatprep.subr.mxu0 0.0
        %482 = vmatpush1.msra.mxu0 0.0
        %483 = vmatprep.subr.mxu0 0.0
        %484 = vmatpush1.msra.mxu0 0.0
        %485 = vmatprep.subr.mxu0 0.0
        %486 = vmatpush1.msra.mxu0 0.0
        %487 = vmatprep.subr.mxu0 0.0
        %488 = vmatpush1.msra.mxu0 0.0
        %489 = vmatprep.subr.mxu0 0.0
        %490 = vmatpush1.msra.mxu0 0.0
        %491 = vmatprep.subr.mxu0 0.0
        %492 = vmatpush1.msra.mxu0 0.0
        %493 = vmatprep.subr.mxu0 0.0
        %494 = vmatpush1.msra.mxu0 0.0
        %495 = vmatprep.subr.mxu0 0.0
        %496 = vmatpush1.msra.mxu0 0.0
        %497 = vmatprep.mubr.f32.mxu0 0.0
        %498 = vmatmul.mubr.f32.gmra.mrb[0].mxu0 %v416
        %v499 = vpop.f32.mrb[0].mxu0
        %v500 = vadd.f32 0.0, %v499
        %v501 = vpop.f32.mrb[0].mxu0
        %v502 = vadd.f32 0.0, %v501
        %503 = vdwg.mxu0
        %v504 = vadd.f32 %v431, %v500
        %v505 = vadd.f32 %v432, %v502
        %506 = vmax.xlane.f32.xlu0 %v505
        %v507 = vpop.xlane.xlu0 %506
        %v508 = vsub.f32 %v505, %v507
        %v509 = vmul.f32 %v508, 1.442695
        %v510 = vpow.pop %v509
        %511 = vadd.xlane.f32.xlu0 %v510
        %v512 = vpop.xlane.xlu0 %511
        %v513 = vlog2.pop %v512
        %v514 = vmul.f32 %v513, 0.6931472
        %v515 = vsub.f32 %v508, %v514
        %s516 = scalar_lea.vmem %s215, 16
        %517 = vst [vmem:[%s516] sm:$0xff] %v515
        %s518 = scalar_lea.vmem %s209, 48
        %v519 = vld [vmem:[%s518] sm:$0xff]
        %v520 = vld [vmem:[%s518 + $0x8] sm:$0xff]
        %521 = vmatprep.subr.mxu0 %v224
        %522 = vmatpush1.msra.mxu0 %v223
        %523 = vmatprep.subr.mxu0 %v226
        %524 = vmatpush1.msra.mxu0 %v225
        %525 = vmatprep.subr.mxu0 %v228
        %526 = vmatpush1.msra.mxu0 %v227
        %527 = vmatprep.subr.mxu0 %v230
        %528 = vmatpush1.msra.mxu0 %v229
        %529 = vmatprep.subr.mxu0 %v232
        %530 = vmatpush1.msra.mxu0 %v231
        %531 = vmatprep.subr.mxu0 %v234
        %532 = vmatpush1.msra.mxu0 %v233
        %533 = vmatprep.subr.mxu0 %v236
        %534 = vmatpush1.msra.mxu0 %v235
        %535 = vmatprep.subr.mxu0 %v238
        %536 = vmatpush1.msra.mxu0 %v237
        %537 = vmatprep.subr.mxu0 %v240
        %538 = vmatpush1.msra.mxu0 %v239
        %539 = vmatprep.subr.mxu0 %v242
        %540 = vmatpush1.msra.mxu0 %v241
        %541 = vmatprep.subr.mxu0 %v244
        %542 = vmatpush1.msra.mxu0 %v243
        %543 = vmatprep.subr.mxu0 %v246
        %544 = vmatpush1.msra.mxu0 %v245
        %545 = vmatprep.subr.mxu0 %v248
        %546 = vmatpush1.msra.mxu0 %v247
        %547 = vmatprep.subr.mxu0 %v250
        %548 = vmatpush1.msra.mxu0 %v249
        %549 = vmatprep.subr.mxu0 %v252
        %550 = vmatpush1.msra.mxu0 %v251
        %551 = vmatprep.subr.mxu0 %v254
        %552 = vmatpush1.msra.mxu0 %v253
        %553 = vmatprep.subr.mxu0 0.0
        %554 = vmatpush1.msra.mxu0 0.0
        %555 = vmatprep.subr.mxu0 0.0
        %556 = vmatpush1.msra.mxu0 0.0
        %557 = vmatprep.subr.mxu0 0.0
        %558 = vmatpush1.msra.mxu0 0.0
        %559 = vmatprep.subr.mxu0 0.0
        %560 = vmatpush1.msra.mxu0 0.0
        %561 = vmatprep.subr.mxu0 0.0
        %562 = vmatpush1.msra.mxu0 0.0
        %563 = vmatprep.subr.mxu0 0.0
        %564 = vmatpush1.msra.mxu0 0.0
        %565 = vmatprep.subr.mxu0 0.0
        %566 = vmatpush1.msra.mxu0 0.0
        %567 = vmatprep.subr.mxu0 0.0
        %568 = vmatpush1.msra.mxu0 0.0
        %569 = vmatprep.subr.mxu0 0.0
        %570 = vmatpush1.msra.mxu0 0.0
        %571 = vmatprep.subr.mxu0 0.0
        %572 = vmatpush1.msra.mxu0 0.0
        %573 = vmatprep.subr.mxu0 0.0
        %574 = vmatpush1.msra.mxu0 0.0
        %575 = vmatprep.subr.mxu0 0.0
        %576 = vmatpush1.msra.mxu0 0.0
        %577 = vmatprep.subr.mxu0 0.0
        %578 = vmatpush1.msra.mxu0 0.0
        %579 = vmatprep.subr.mxu0 0.0
        %580 = vmatpush1.msra.mxu0 0.0
        %581 = vmatprep.subr.mxu0 0.0
        %582 = vmatpush1.msra.mxu0 0.0
        %583 = vmatprep.subr.mxu0 0.0
        %584 = vmatpush1.msra.mxu0 0.0
        %585 = vmatprep.mubr.f32.mxu0 0.0
        %586 = vmatmul.mubr.f32.gmra.mrb[0].mxu0 %v504
        %v587 = vpop.f32.mrb[0].mxu0
        %v588 = vadd.f32 0.0, %v587
        %v589 = vpop.f32.mrb[0].mxu0
        %v590 = vadd.f32 0.0, %v589
        %591 = vdwg.mxu0
        %v592 = vadd.f32 %v519, %v588
        %v593 = vadd.f32 %v520, %v590
        %594 = vmax.xlane.f32.xlu0 %v593
        %v595 = vpop.xlane.xlu0 %594
        %v596 = vsub.f32 %v593, %v595
        %v597 = vmul.f32 %v596, 1.442695
        %v598 = vpow.pop %v597
        %599 = vadd.xlane.f32.xlu0 %v598
        %v600 = vpop.xlane.xlu0 %599
        %v601 = vlog2.pop %v600
        %v602 = vmul.f32 %v601, 0.6931472
        %v603 = vsub.f32 %v596, %v602
        %s604 = scalar_lea.vmem %s215, 24
        %605 = vst [vmem:[%s604] sm:$0xff] %v603
        %606 = vst [vmem:[%s4] sm:$0xff] %v592
        %s607 = smul.u32 4, %s17
        %p608 = scmp.lt.s32.totalorder %s607, 7
        %s609 = scalar_select %p608, %s607, 7
        %s610 = smul.addr %s609, 8
        %s611 = scalar_lea.vmem %s3, %s610
        // Predicated region
        $region41: #{rnn_forward_sequence.1} parent=31 // pred_check
          %p612 = pneg %p103
        $region42: #{rnn_forward_sequence.1} parent=31 // pred_check_branch
          %614 = sbr.rel (%p612) target = $region44
        $region43: #{rnn_forward_sequence.1} parent=31 // pred_region
          %s615 = smul.u32 4, %s17
        $region44: #{rnn_forward_sequence.1} parent=31 // pred_fallthru
          _
        // Predicated region
        $region45: #{rnn_forward_sequence.1} parent=31 // pred_check
          %p616 = pneg %p124
        $region46: #{rnn_forward_sequence.1} parent=31 // pred_check_branch
          %618 = sbr.rel (%p616) target = $region48
        $region47: #{rnn_forward_sequence.1} parent=31 // pred_region
          _
        $region48: #{rnn_forward_sequence.1} parent=31 // pred_fallthru
          _
        // Predicated region
        $region49: #{rnn_forward_sequence.1} parent=31 // pred_check
          %p619 = pneg %p124
        $region50: #{rnn_forward_sequence.1} parent=31 // pred_check_branch
          %621 = sbr.rel (%p619) target = $region52
        $region51: #{rnn_forward_sequence.1} parent=31 // pred_region
          _
        $region52: #{rnn_forward_sequence.1} parent=31 // pred_fallthru
          _
      $region32: #{rnn_forward_sequence.1} parent=5 // pred_fallthru
        _
      %p622 = scmp.le.s32.totalorder 2, %s12
      // Predicated region
      $region53: #{rnn_forward_sequence.1} parent=5 // pred_check
        %p623 = pneg %p622
      $region54: #{rnn_forward_sequence.1} parent=5 // pred_check_branch
        %625 = sbr.rel (%p623) target = $region56
      $region55: #{rnn_forward_sequence.1} parent=5 // pred_region
        %s626 = ssub.s32 %s12, 2
        // Predicated region
        $region57: #{rnn_forward_sequence.1} parent=55 // pred_check
          %p627 = pneg %p109
        $region58: #{rnn_forward_sequence.1} parent=55 // pred_check_branch
          %629 = sbr.rel (%p627) target = $region60
        $region59: #{rnn_forward_sequence.1} parent=55 // pred_region
          %s630 = smul.u32 4, %s18
          %p631 = scmp.lt.s32.totalorder %s630, 7
          %s632 = scalar_select %p631, %s630, 7
          %s633 = smul.addr %s632, 8
          %s634 = scalar_lea.vmem %s3, %s633
        $region60: #{rnn_forward_sequence.1} parent=55 // pred_fallthru
          _
      $region56: #{rnn_forward_sequence.1} parent=5 // pred_fallthru
        _
    $region6: #{rnn_forward_sequence.1} parent=1 // loop_footer
      %s16 = sadd.s32 1, %s12
    $region7: #{rnn_forward_sequence.1} parent=1 // loop_footer_branch
      %11 = sbr.rel target = $region3
    $region8: #{rnn_forward_sequence.1} parent=1 // loop_exit
      _
    %635 = vsyncpa [#allocation3], 1
    %s636 = scalar_lea.sflag [#allocation3], 1
    %637 = vsyncpa %s636, 1

</llo_original>
